<compile_context>
chip_gen: v7x
topology: tpu7x:2x2x1
jax: 0.10.0
libtpu: 0.0.40
codegen_flags: <defaults>
</compile_context>

<pallas_src>
import functools

import jax
import jax.numpy as jnp
import numpy as np
from jax.experimental import pallas as pl
from jax.experimental.pallas import tpu as pltpu


def _round_up(x, m):
    return (x + m - 1) // m * m


def _pick_batch_tile(b_pad):
    """Largest multiple-of-8 divisor of b_pad that is <= 512 and leaves at
    least 2 grid steps when b_pad >= 16 (so the "parallel" batch axis can be
    sharded across both v7x TensorCores)."""
    target = min(512, b_pad if b_pad < 16 else b_pad // 2)
    best, t = 8, 8
    while t <= b_pad:
        if b_pad % t == 0 and t <= target:
            best = t
        t += 8
    return best


def _sgva_kernel(text_ref, twhi_ref, twlo_ref, b_ref, o_ref, *,
                 seq_len, num_classes, vocab_tile):
    k = pl.program_id(1)

    @pl.when(k == 0)
    def _init():
        o_ref[...] = jnp.zeros_like(o_ref)

    ids = text_ref[...]                                   # (TB, S) int32
    tb = ids.shape[0]

    # --- per-strip token counts (embedding-bag-as-matmul trick) -------------
    # counts[b, v] = #occurrences of vocab id (k*TV + v) in row b.  Shift the
    # small (TB, S) id block instead of the big (TB, TV) iota.
    ids_local = ids - k * vocab_tile
    strip_iota = jax.lax.broadcasted_iota(jnp.int32, (tb, vocab_tile), 1)

    def _add_token(tok_col, c):
        return c + (strip_iota == tok_col).astype(jnp.float32)

    counts = jnp.zeros((tb, vocab_tile), jnp.float32)
    if seq_len <= 64:                                     # small S: full unroll
        for s in range(seq_len):
            counts = _add_token(ids_local[:, s:s + 1], counts)
    else:                                                 # long S: partial unroll
        def _body(s, c):
            tok = jax.lax.dynamic_slice_in_dim(ids_local, s, 1, axis=1)
            return _add_token(tok, c)
        counts = jax.lax.fori_loop(0, seq_len, _body, counts, unroll=8)

    # counts are exact integers <= seq_len <= 256, so the bf16 cast is exact
    # and each dot below is a single native bf16 MXU pass (no multi-pass
    # f32-precision emulation).  TW_hi + TW_lo reconstructs ~f32 precision.
    counts_bf = counts.astype(jnp.bfloat16)
    o_ref[...] += (
        jnp.dot(counts_bf, twhi_ref[...], preferred_element_type=jnp.float32)
        + jnp.dot(counts_bf, twlo_ref[...], preferred_element_type=jnp.float32))

    # --- finalize on the last vocab strip: bias, class mask, log_softmax ----
    @pl.when(k == pl.num_programs(1) - 1)
    def _finalize():
        logits = o_ref[...] + b_ref[...]                  # (TB, E_pad)
        lane = jax.lax.broadcasted_iota(jnp.int32, logits.shape, 1)
        logits = jnp.where(lane < num_classes, logits, jnp.float32(-1e30))
        m = jnp.max(logits, axis=-1, keepdims=True)
        shifted = logits - m
        lse = jnp.log(jnp.sum(jnp.exp(shifted), axis=-1, keepdims=True))
        o_ref[...] = (shifted - lse).astype(o_ref.dtype)


def sgva_make_params(emb_table, w, b, seq_len, *, max_vocab_tile=1024):
    """One-time prep of the frozen SGVA parameters (hoisted out of the
    per-call path): fuse embedding table with the linear weight, fold in the
    1/seq_len mean scale, pad to lane-dense shapes, split into bf16 hi/lo."""
    V, D = emb_table.shape
    E = w.shape[1]
    assert seq_len <= 256, "bf16 hi/lo path requires seq_len <= 256"
    # TODO(synk): for seq_len > 256 fall back to f32 counts + HIGHEST matmul.

    tw = jnp.dot(emb_table.astype(jnp.float32), w.astype(jnp.float32),
                 precision=jax.lax.Precision.HIGHEST) * jnp.float32(1.0 / seq_len)

    E_pad = _round_up(E, 128)
    V_pad = _round_up(V, 128)
    TV = min(V_pad, max_vocab_tile)
    V_pad = _round_up(V_pad, TV)                          # whole number of strips

    tw_p = jnp.zeros((V_pad, E_pad), jnp.float32).at[:V, :E].set(tw)
    tw_hi = tw_p.astype(jnp.bfloat16)
    tw_lo = (tw_p - tw_hi.astype(jnp.float32)).astype(jnp.bfloat16)
    b_p = jnp.zeros((1, E_pad), jnp.float32).at[:, :E].set(
        jnp.asarray(b, jnp.float32).reshape(1, E))

    return {"tw_hi": tw_hi, "tw_lo": tw_lo, "bias": b_p,
            "num_classes": int(E), "seq_len": int(seq_len),
            "vocab_tile": int(TV), "e_pad": int(E_pad)}


def _vmem_limit_bytes(tb, seq_len, tv, e_pad, tw_buffers):
    # Pipelined blocks (per BlockSpec x buffer count) + in-kernel temporaries
    # (counts f32 + bf16, iota, softmax temps) + headroom, clamped to a
    # per-generation usable budget derived from the actual VMEM capacity.
    blocks = (tb * seq_len * 4 * 2                  # token-id tile (double buffered)
              + 2 * tv * e_pad * 2 * tw_buffers     # TW hi + lo strips (bf16)
              + e_pad * 4                           # bias (single buffered)
              + tb * e_pad * 4 * 2)                 # resident/output block
    temps = tb * tv * (4 + 4 + 2) + 6 * tb * e_pad * 4
    need = blocks + temps + (8 << 20)               # compiler scratch / spill headroom
    try:
        cap = int(getattr(pltpu.get_tpu_info(), "vmem_capacity_bytes", 64 << 20))
    except Exception:                               # pragma: no cover
        cap = 64 << 20
    usable = cap - ((28 << 20) if cap >= (96 << 20) else (8 << 20))
    return int(min(max(need, 16 << 20), usable))


def sgva_forward(params, text):
    """text: (B, S) int token ids.  Returns (B, E) f32 log-probabilities."""
    B, S = text.shape
    assert S == params["seq_len"], "seq_len is baked into the fused table"
    E = params["num_classes"]
    E_pad = params["e_pad"]
    TV = params["vocab_tile"]
    tw_hi, tw_lo, bias = params["tw_hi"], params["tw_lo"], params["bias"]
    V_pad = tw_hi.shape[0]

    B_pad = _round_up(B, 8)
    TB = _pick_batch_tile(B_pad)
    nb, nk = B_pad // TB, V_pad // TV

    text_p = jnp.zeros((B_pad, S), jnp.int32).at[:B, :].set(text.astype(jnp.int32))

    kernel = functools.partial(_sgva_kernel, seq_len=S, num_classes=E, vocab_tile=TV)
    tw_single = (nk == 1)   # TW strips are grid-constant only if one strip covers V

    def _call(use_buffered):
        def _spec(shape, index_map, single):
            if use_buffered and single:
                return pl.BlockSpec(shape, index_map, pipeline_mode=pl.Buffered(1))
            return pl.BlockSpec(shape, index_map)

        grid_spec = pltpu.PrefetchScalarGridSpec(
            num_scalar_prefetch=0,
            grid=(nb, nk),
            in_specs=[
                pl.BlockSpec((TB, S), lambda i, k: (i, 0)),               # token ids
                _spec((TV, E_pad), lambda i, k: (k, 0), tw_single),       # TW hi strip
                _spec((TV, E_pad), lambda i, k: (k, 0), tw_single),       # TW lo strip
                _spec((1, E_pad), lambda i, k: (0, 0), True),             # bias
            ],
            out_specs=pl.BlockSpec((TB, E_pad), lambda i, k: (i, 0)),
        )
        vmem_limit = _vmem_limit_bytes(
            TB, S, TV, E_pad, tw_buffers=1 if (use_buffered and tw_single) else 2)
        return pl.pallas_call(
            kernel,
            out_shape=jax.ShapeDtypeStruct((B_pad, E_pad), jnp.float32),
            grid_spec=grid_spec,
            compiler_params=pltpu.CompilerParams(
                dimension_semantics=("parallel", "arbitrary"),
                vmem_limit_bytes=vmem_limit),
        )(text_p, tw_hi, tw_lo, bias)

    try:
        out = _call(True)
    except Exception:   # pragma: no cover - jax without pipeline_mode=Buffered(1)
        out = _call(False)

    return out[:B, :E]


def sgva_reference(text, emb_table, w, b):
    word_embeddings = emb_table[text]                        # (B, S, D)
    sequence_embeddings = jnp.mean(word_embeddings, axis=1)  # (B, D)
    logits = jnp.dot(sequence_embeddings, w,
                     precision=jax.lax.Precision.HIGHEST) + b
    return jax.nn.log_softmax(logits, axis=1)


if __name__ == "__main__":
    # small, deterministic shapes consistent with the module's forward
    batch = 2
    seq = 8
    vocab_size = 50
    embedding_dim = 32
    emoji_num = 5

    key = jax.random.PRNGKey(0)
    k_text, k_emb, k_w, k_b = jax.random.split(key, 4)

    text = jax.random.randint(k_text, (batch, seq), 0, vocab_size, dtype=jnp.int32)
    # deterministic stand-in for the frozen wordvec_matrix embedding weights
    emb_table = jax.random.normal(k_emb, (vocab_size, embedding_dim), dtype=jnp.float32)
    # nn.Linear(embedding_dim, emoji_num): stored as (D, E) weight, (1, E) bias
    w = jax.random.normal(k_w, (embedding_dim, emoji_num), dtype=jnp.float32) * 0.1
    b = jax.random.normal(k_b, (1, emoji_num), dtype=jnp.float32) * 0.1

    params = sgva_make_params(emb_table, w, b, seq_len=seq)   # one-time frozen prep
    out = jax.block_until_ready(sgva_forward(params, text))
    ref = jax.block_until_ready(sgva_reference(text, emb_table, w, b))

    assert out.shape == (batch, emoji_num)
    err = float(np.max(np.abs(np.asarray(out) - np.asarray(ref))))
    assert np.allclose(np.asarray(out), np.asarray(ref), rtol=1e-4, atol=1e-4), err

    print("KERNEL_OK")
</pallas_src>

<mosaic_0001>
module attributes {stable_mosaic.version = 11 : i64} {
  func.func @_sgva_kernel(%arg0: i32, %arg1: i32, %arg2: memref<8x8xi32, #tpu.memory_space<vmem>>, %arg3: memref<128x128xbf16, #tpu.memory_space<vmem>>, %arg4: memref<128x128xbf16, #tpu.memory_space<vmem>>, %arg5: memref<1x128xf32, #tpu.memory_space<vmem>>, %arg6: memref<8x128xf32, #tpu.memory_space<vmem>>) attributes {dimension_semantics = [#tpu.dimension_semantics<parallel>, #tpu.dimension_semantics<arbitrary>], iteration_bounds = array<i64: 1, 1>, scalar_prefetch = 0 : i64, scratch_operands = 0 : i64, tpu.core_type = #tpu.core_type<tc>, window_params = [{transform_indices = @transform_0, window_bounds = array<i64: 8, 8>}, {pipeline_mode = #tpu.pipeline_mode<synchronous>, transform_indices = @transform_1, window_bounds = array<i64: 128, 128>}, {pipeline_mode = #tpu.pipeline_mode<synchronous>, transform_indices = @transform_2, window_bounds = array<i64: 128, 128>}, {pipeline_mode = #tpu.pipeline_mode<synchronous>, transform_indices = @transform_3, window_bounds = array<i64: 1, 128>}, {transform_indices = @transform_4, window_bounds = array<i64: 8, 128>}]} {
    %c0_i32 = arith.constant 0 : i32
    %0 = arith.cmpi eq, %arg1, %c0_i32 : i32
    %1 = arith.extui %0 : i1 to i32
    %c0_i32_0 = arith.constant 0 : i32
    %2 = arith.cmpi ne, %1, %c0_i32_0 : i32
    scf.if %2 {
      %cst_14 = arith.constant 0.000000e+00 : f32
      %69 = vector.broadcast %cst_14 : f32 to vector<8x128xf32>
      %c0_15 = arith.constant 0 : index
      %c0_16 = arith.constant 0 : index
      %70 = vector.load %arg6[%c0_15, %c0_16] : memref<8x128xf32, #tpu.memory_space<vmem>>, vector<8x128xf32>
      tpu.vector_store %arg6[%c0_15, %c0_16], %69 {strides = array<i32>} : memref<8x128xf32, #tpu.memory_space<vmem>>, vector<8x128xf32>,
    } else {
    }
    %c0 = arith.constant 0 : index
    %c0_1 = arith.constant 0 : index
    %3 = vector.load %arg2[%c0, %c0_1] : memref<8x8xi32, #tpu.memory_space<vmem>>, vector<8x8xi32>
    %c128_i32 = arith.constant 128 : i32
    %4 = arith.muli %arg1, %c128_i32 : i32
    %5 = vector.broadcast %4 : i32 to vector<8x8xi32>
    %6 = arith.subi %3, %5 : vector<8x8xi32>
    %7 = tpu.iota {dimensions = array<i32: 1>} : vector<8x128xi32>
    %cst = arith.constant 0.000000e+00 : f32
    %8 = vector.broadcast %cst : f32 to vector<8x128xf32>
    %9 = vector.extract_strided_slice %6 {offsets = [0, 0], sizes = [8, 1], strides = [1, 1]} : vector<8x8xi32> to vector<8x1xi32>
    %10 = vector.broadcast %9 : vector<8x1xi32> to vector<8x128xi32>
    %11 = arith.cmpi eq, %7, %10 : vector<8x128xi32>
    %12 = arith.extui %11 : vector<8x128xi1> to vector<8x128xi32>
    %13 = arith.sitofp %12 : vector<8x128xi32> to vector<8x128xf32>
    %14 = arith.addf %8, %13 : vector<8x128xf32>
    %15 = vector.extract_strided_slice %6 {offsets = [0, 1], sizes = [8, 1], strides = [1, 1]} : vector<8x8xi32> to vector<8x1xi32>
    %16 = vector.broadcast %15 : vector<8x1xi32> to vector<8x128xi32>
    %17 = arith.cmpi eq, %7, %16 : vector<8x128xi32>
    %18 = arith.extui %17 : vector<8x128xi1> to vector<8x128xi32>
    %19 = arith.sitofp %18 : vector<8x128xi32> to vector<8x128xf32>
    %20 = arith.addf %14, %19 : vector<8x128xf32>
    %21 = vector.extract_strided_slice %6 {offsets = [0, 2], sizes = [8, 1], strides = [1, 1]} : vector<8x8xi32> to vector<8x1xi32>
    %22 = vector.broadcast %21 : vector<8x1xi32> to vector<8x128xi32>
    %23 = arith.cmpi eq, %7, %22 : vector<8x128xi32>
    %24 = arith.extui %23 : vector<8x128xi1> to vector<8x128xi32>
    %25 = arith.sitofp %24 : vector<8x128xi32> to vector<8x128xf32>
    %26 = arith.addf %20, %25 : vector<8x128xf32>
    %27 = vector.extract_strided_slice %6 {offsets = [0, 3], sizes = [8, 1], strides = [1, 1]} : vector<8x8xi32> to vector<8x1xi32>
    %28 = vector.broadcast %27 : vector<8x1xi32> to vector<8x128xi32>
    %29 = arith.cmpi eq, %7, %28 : vector<8x128xi32>
    %30 = arith.extui %29 : vector<8x128xi1> to vector<8x128xi32>
    %31 = arith.sitofp %30 : vector<8x128xi32> to vector<8x128xf32>
    %32 = arith.addf %26, %31 : vector<8x128xf32>
    %33 = vector.extract_strided_slice %6 {offsets = [0, 4], sizes = [8, 1], strides = [1, 1]} : vector<8x8xi32> to vector<8x1xi32>
    %34 = vector.broadcast %33 : vector<8x1xi32> to vector<8x128xi32>
    %35 = arith.cmpi eq, %7, %34 : vector<8x128xi32>
    %36 = arith.extui %35 : vector<8x128xi1> to vector<8x128xi32>
    %37 = arith.sitofp %36 : vector<8x128xi32> to vector<8x128xf32>
    %38 = arith.addf %32, %37 : vector<8x128xf32>
    %39 = vector.extract_strided_slice %6 {offsets = [0, 5], sizes = [8, 1], strides = [1, 1]} : vector<8x8xi32> to vector<8x1xi32>
    %40 = vector.broadcast %39 : vector<8x1xi32> to vector<8x128xi32>
    %41 = arith.cmpi eq, %7, %40 : vector<8x128xi32>
    %42 = arith.extui %41 : vector<8x128xi1> to vector<8x128xi32>
    %43 = arith.sitofp %42 : vector<8x128xi32> to vector<8x128xf32>
    %44 = arith.addf %38, %43 : vector<8x128xf32>
    %45 = vector.extract_strided_slice %6 {offsets = [0, 6], sizes = [8, 1], strides = [1, 1]} : vector<8x8xi32> to vector<8x1xi32>
    %46 = vector.broadcast %45 : vector<8x1xi32> to vector<8x128xi32>
    %47 = arith.cmpi eq, %7, %46 : vector<8x128xi32>
    %48 = arith.extui %47 : vector<8x128xi1> to vector<8x128xi32>
    %49 = arith.sitofp %48 : vector<8x128xi32> to vector<8x128xf32>
    %50 = arith.addf %44, %49 : vector<8x128xf32>
    %51 = vector.extract_strided_slice %6 {offsets = [0, 7], sizes = [8, 1], strides = [1, 1]} : vector<8x8xi32> to vector<8x1xi32>
    %52 = vector.broadcast %51 : vector<8x1xi32> to vector<8x128xi32>
    %53 = arith.cmpi eq, %7, %52 : vector<8x128xi32>
    %54 = arith.extui %53 : vector<8x128xi1> to vector<8x128xi32>
    %55 = arith.sitofp %54 : vector<8x128xi32> to vector<8x128xf32>
    %56 = arith.addf %50, %55 : vector<8x128xf32>
    %57 = arith.truncf %56 : vector<8x128xf32> to vector<8x128xbf16>
    %c0_2 = arith.constant 0 : index
    %c0_3 = arith.constant 0 : index
    %58 = vector.load %arg6[%c0_2, %c0_3] : memref<8x128xf32, #tpu.memory_space<vmem>>, vector<8x128xf32>
    %c0_4 = arith.constant 0 : index
    %c0_5 = arith.constant 0 : index
    %59 = vector.load %arg3[%c0_4, %c0_5] : memref<128x128xbf16, #tpu.memory_space<vmem>>, vector<128x128xbf16>
    %cst_6 = arith.constant dense<0.000000e+00> : vector<8x128xf32>
    %60 = tpu.matmul %57, %59, %cst_6 {dimension_numbers = #tpu.dot_dimension_numbers<[1], [0], [0], [1], [0, 0, 1, 1], [], []>} : vector<8x128xbf16>, vector<128x128xbf16>, vector<8x128xf32> -> vector<8x128xf32>
    %c0_7 = arith.constant 0 : index
    %c0_8 = arith.constant 0 : index
    %61 = vector.load %arg4[%c0_7, %c0_8] : memref<128x128xbf16, #tpu.memory_space<vmem>>, vector<128x128xbf16>
    %cst_9 = arith.constant dense<0.000000e+00> : vector<8x128xf32>
    %62 = tpu.matmul %57, %61, %cst_9 {dimension_numbers = #tpu.dot_dimension_numbers<[1], [0], [0], [1], [0, 0, 1, 1], [], []>} : vector<8x128xbf16>, vector<128x128xbf16>, vector<8x128xf32> -> vector<8x128xf32>
    %63 = arith.addf %60, %62 : vector<8x128xf32>
    %64 = arith.addf %58, %63 : vector<8x128xf32>
    %c0_10 = arith.constant 0 : index
    %c0_11 = arith.constant 0 : index
    %65 = vector.load %arg6[%c0_10, %c0_11] : memref<8x128xf32, #tpu.memory_space<vmem>>, vector<8x128xf32>
    tpu.vector_store %arg6[%c0_10, %c0_11], %64 {strides = array<i32>} : memref<8x128xf32, #tpu.memory_space<vmem>>, vector<8x128xf32>,
    %c0_i32_12 = arith.constant 0 : i32
    %66 = arith.cmpi eq, %arg1, %c0_i32_12 : i32
    %67 = arith.extui %66 : i1 to i32
    %c0_i32_13 = arith.constant 0 : i32
    %68 = arith.cmpi ne, %67, %c0_i32_13 : i32
    scf.if %68 {
      %c0_14 = arith.constant 0 : index
      %c0_15 = arith.constant 0 : index
      %69 = vector.load %arg6[%c0_14, %c0_15] : memref<8x128xf32, #tpu.memory_space<vmem>>, vector<8x128xf32>
      %c0_16 = arith.constant 0 : index
      %c0_17 = arith.constant 0 : index
      %70 = vector.load %arg5[%c0_16, %c0_17] : memref<1x128xf32, #tpu.memory_space<vmem>>, vector<1x128xf32>
      %71 = vector.broadcast %70 : vector<1x128xf32> to vector<8x128xf32>
      %72 = arith.addf %69, %71 : vector<8x128xf32>
      %73 = tpu.iota {dimensions = array<i32: 1>} : vector<8x128xi32>
      %c5_i32 = arith.constant 5 : i32
      %74 = vector.broadcast %c5_i32 : i32 to vector<8x128xi32>
      %75 = arith.cmpi slt, %73, %74 : vector<8x128xi32>
      %cst_18 = arith.constant -1.000000e+30 : f32
      %76 = vector.broadcast %cst_18 : f32 to vector<8x128xf32>
      %77 = arith.select %75, %72, %76 : vector<8x128xi1>, vector<8x128xf32>
      %cst_19 = arith.constant dense<0xFF800000> : vector<8xf32>
      %78 = vector.multi_reduction <maximumf>, %77, %cst_19 [1] : vector<8x128xf32> to vector<8xf32>
      %79 = vector.shape_cast %78 : vector<8xf32> to vector<8x1xf32>
      %80 = vector.broadcast %79 : vector<8x1xf32> to vector<8x128xf32>
      %81 = arith.subf %77, %80 : vector<8x128xf32>
      %82 = math.exp %81 : vector<8x128xf32>
      %cst_20 = arith.constant dense<0.000000e+00> : vector<8xf32>
      %83 = vector.multi_reduction <add>, %82, %cst_20 [1] : vector<8x128xf32> to vector<8xf32>
      %84 = vector.shape_cast %83 : vector<8xf32> to vector<8x1xf32>
      %85 = math.log %84 : vector<8x1xf32>
      %86 = vector.broadcast %85 : vector<8x1xf32> to vector<8x128xf32>
      %87 = arith.subf %81, %86 : vector<8x128xf32>
      %c0_21 = arith.constant 0 : index
      %c0_22 = arith.constant 0 : index
      %88 = vector.load %arg6[%c0_21, %c0_22] : memref<8x128xf32, #tpu.memory_space<vmem>>, vector<8x128xf32>
      tpu.vector_store %arg6[%c0_21, %c0_22], %87 {strides = array<i32>} : memref<8x128xf32, #tpu.memory_space<vmem>>, vector<8x128xf32>,
    } else {
    }
    return
  }
  func.func @transform_0(%arg0: i32, %arg1: i32) -> (i32, i32) {
    %c0_i32 = arith.constant 0 : i32
    %c0_i32_0 = arith.constant 0 : i32
    return %arg0, %c0_i32 : i32, i32
  }
  func.func @transform_1(%arg0: i32, %arg1: i32) -> (i32, i32) {
    %c0_i32 = arith.constant 0 : i32
    %c0_i32_0 = arith.constant 0 : i32
    return %arg1, %c0_i32 : i32, i32
  }
  func.func @transform_2(%arg0: i32, %arg1: i32) -> (i32, i32) {
    %c0_i32 = arith.constant 0 : i32
    %c0_i32_0 = arith.constant 0 : i32
    return %arg1, %c0_i32 : i32, i32
  }
  func.func @transform_3(%arg0: i32, %arg1: i32) -> (i32, i32) {
    %c0_i32 = arith.constant 0 : i32
    %c0_i32_0 = arith.constant 0 : i32
    %c0_i32_1 = arith.constant 0 : i32
    return %c0_i32, %c0_i32_0 : i32, i32
  }
  func.func @transform_4(%arg0: i32, %arg1: i32) -> (i32, i32) {
    %c0_i32 = arith.constant 0 : i32
    %c0_i32_0 = arith.constant 0 : i32
    return %arg0, %c0_i32 : i32, i32
  }
}

module attributes {stable_mosaic.version = 11 : i64} {
  func.func @_sgva_kernel(%arg0: i32, %arg1: i32, %arg2: memref<8x8xi32, #tpu.memory_space<vmem>>, %arg3: memref<128x128xbf16, #tpu.memory_space<vmem>>, %arg4: memref<128x128xbf16, #tpu.memory_space<vmem>>, %arg5: memref<1x128xf32, #tpu.memory_space<vmem>>, %arg6: memref<8x128xf32, #tpu.memory_space<vmem>>) attributes {dimension_semantics = [#tpu.dimension_semantics<parallel>, #tpu.dimension_semantics<arbitrary>], iteration_bounds = array<i64: 1, 1>, scalar_prefetch = 0 : i64, scratch_operands = 0 : i64, tpu.core_type = #tpu.core_type<tc>, window_params = [{transform_indices = @transform_0, window_bounds = array<i64: 8, 8>}, {transform_indices = @transform_1, window_bounds = array<i64: 128, 128>}, {transform_indices = @transform_2, window_bounds = array<i64: 128, 128>}, {pipeline_mode = #tpu.pipeline_mode<synchronous>, transform_indices = @transform_3, window_bounds = array<i64: 1, 128>}, {transform_indices = @transform_4, window_bounds = array<i64: 8, 128>}]} {
    %c0_i32 = arith.constant 0 : i32
    %0 = arith.cmpi eq, %arg1, %c0_i32 : i32
    %1 = arith.extui %0 : i1 to i32
    %c0_i32_0 = arith.constant 0 : i32
    %2 = arith.cmpi ne, %1, %c0_i32_0 : i32
    scf.if %2 {
      %cst_14 = arith.constant 0.000000e+00 : f32
      %69 = vector.broadcast %cst_14 : f32 to vector<8x128xf32>
      %c0_15 = arith.constant 0 : index
      %c0_16 = arith.constant 0 : index
      %70 = vector.load %arg6[%c0_15, %c0_16] : memref<8x128xf32, #tpu.memory_space<vmem>>, vector<8x128xf32>
      tpu.vector_store %arg6[%c0_15, %c0_16], %69 {strides = array<i32>} : memref<8x128xf32, #tpu.memory_space<vmem>>, vector<8x128xf32>,
    } else {
    }
    %c0 = arith.constant 0 : index
    %c0_1 = arith.constant 0 : index
    %3 = vector.load %arg2[%c0, %c0_1] : memref<8x8xi32, #tpu.memory_space<vmem>>, vector<8x8xi32>
    %c128_i32 = arith.constant 128 : i32
    %4 = arith.muli %arg1, %c128_i32 : i32
    %5 = vector.broadcast %4 : i32 to vector<8x8xi32>
    %6 = arith.subi %3, %5 : vector<8x8xi32>
    %7 = tpu.iota {dimensions = array<i32: 1>} : vector<8x128xi32>
    %cst = arith.constant 0.000000e+00 : f32
    %8 = vector.broadcast %cst : f32 to vector<8x128xf32>
    %9 = vector.extract_strided_slice %6 {offsets = [0, 0], sizes = [8, 1], strides = [1, 1]} : vector<8x8xi32> to vector<8x1xi32>
    %10 = vector.broadcast %9 : vector<8x1xi32> to vector<8x128xi32>
    %11 = arith.cmpi eq, %7, %10 : vector<8x128xi32>
    %12 = arith.extui %11 : vector<8x128xi1> to vector<8x128xi32>
    %13 = arith.sitofp %12 : vector<8x128xi32> to vector<8x128xf32>
    %14 = arith.addf %8, %13 : vector<8x128xf32>
    %15 = vector.extract_strided_slice %6 {offsets = [0, 1], sizes = [8, 1], strides = [1, 1]} : vector<8x8xi32> to vector<8x1xi32>
    %16 = vector.broadcast %15 : vector<8x1xi32> to vector<8x128xi32>
    %17 = arith.cmpi eq, %7, %16 : vector<8x128xi32>
    %18 = arith.extui %17 : vector<8x128xi1> to vector<8x128xi32>
    %19 = arith.sitofp %18 : vector<8x128xi32> to vector<8x128xf32>
    %20 = arith.addf %14, %19 : vector<8x128xf32>
    %21 = vector.extract_strided_slice %6 {offsets = [0, 2], sizes = [8, 1], strides = [1, 1]} : vector<8x8xi32> to vector<8x1xi32>
    %22 = vector.broadcast %21 : vector<8x1xi32> to vector<8x128xi32>
    %23 = arith.cmpi eq, %7, %22 : vector<8x128xi32>
    %24 = arith.extui %23 : vector<8x128xi1> to vector<8x128xi32>
    %25 = arith.sitofp %24 : vector<8x128xi32> to vector<8x128xf32>
    %26 = arith.addf %20, %25 : vector<8x128xf32>
    %27 = vector.extract_strided_slice %6 {offsets = [0, 3], sizes = [8, 1], strides = [1, 1]} : vector<8x8xi32> to vector<8x1xi32>
    %28 = vector.broadcast %27 : vector<8x1xi32> to vector<8x128xi32>
    %29 = arith.cmpi eq, %7, %28 : vector<8x128xi32>
    %30 = arith.extui %29 : vector<8x128xi1> to vector<8x128xi32>
    %31 = arith.sitofp %30 : vector<8x128xi32> to vector<8x128xf32>
    %32 = arith.addf %26, %31 : vector<8x128xf32>
    %33 = vector.extract_strided_slice %6 {offsets = [0, 4], sizes = [8, 1], strides = [1, 1]} : vector<8x8xi32> to vector<8x1xi32>
    %34 = vector.broadcast %33 : vector<8x1xi32> to vector<8x128xi32>
    %35 = arith.cmpi eq, %7, %34 : vector<8x128xi32>
    %36 = arith.extui %35 : vector<8x128xi1> to vector<8x128xi32>
    %37 = arith.sitofp %36 : vector<8x128xi32> to vector<8x128xf32>
    %38 = arith.addf %32, %37 : vector<8x128xf32>
    %39 = vector.extract_strided_slice %6 {offsets = [0, 5], sizes = [8, 1], strides = [1, 1]} : vector<8x8xi32> to vector<8x1xi32>
    %40 = vector.broadcast %39 : vector<8x1xi32> to vector<8x128xi32>
    %41 = arith.cmpi eq, %7, %40 : vector<8x128xi32>
    %42 = arith.extui %41 : vector<8x128xi1> to vector<8x128xi32>
    %43 = arith.sitofp %42 : vector<8x128xi32> to vector<8x128xf32>
    %44 = arith.addf %38, %43 : vector<8x128xf32>
    %45 = vector.extract_strided_slice %6 {offsets = [0, 6], sizes = [8, 1], strides = [1, 1]} : vector<8x8xi32> to vector<8x1xi32>
    %46 = vector.broadcast %45 : vector<8x1xi32> to vector<8x128xi32>
    %47 = arith.cmpi eq, %7, %46 : vector<8x128xi32>
    %48 = arith.extui %47 : vector<8x128xi1> to vector<8x128xi32>
    %49 = arith.sitofp %48 : vector<8x128xi32> to vector<8x128xf32>
    %50 = arith.addf %44, %49 : vector<8x128xf32>
    %51 = vector.extract_strided_slice %6 {offsets = [0, 7], sizes = [8, 1], strides = [1, 1]} : vector<8x8xi32> to vector<8x1xi32>
    %52 = vector.broadcast %51 : vector<8x1xi32> to vector<8x128xi32>
    %53 = arith.cmpi eq, %7, %52 : vector<8x128xi32>
    %54 = arith.extui %53 : vector<8x128xi1> to vector<8x128xi32>
    %55 = arith.sitofp %54 : vector<8x128xi32> to vector<8x128xf32>
    %56 = arith.addf %50, %55 : vector<8x128xf32>
    %57 = arith.truncf %56 : vector<8x128xf32> to vector<8x128xbf16>
    %c0_2 = arith.constant 0 : index
    %c0_3 = arith.constant 0 : index
    %58 = vector.load %arg6[%c0_2, %c0_3] : memref<8x128xf32, #tpu.memory_space<vmem>>, vector<8x128xf32>
    %c0_4 = arith.constant 0 : index
    %c0_5 = arith.constant 0 : index
    %59 = vector.load %arg3[%c0_4, %c0_5] : memref<128x128xbf16, #tpu.memory_space<vmem>>, vector<128x128xbf16>
    %cst_6 = arith.constant dense<0.000000e+00> : vector<8x128xf32>
    %60 = tpu.matmul %57, %59, %cst_6 {dimension_numbers = #tpu.dot_dimension_numbers<[1], [0], [0], [1], [0, 0, 1, 1], [], []>} : vector<8x128xbf16>, vector<128x128xbf16>, vector<8x128xf32> -> vector<8x128xf32>
    %c0_7 = arith.constant 0 : index
    %c0_8 = arith.constant 0 : index
    %61 = vector.load %arg4[%c0_7, %c0_8] : memref<128x128xbf16, #tpu.memory_space<vmem>>, vector<128x128xbf16>
    %cst_9 = arith.constant dense<0.000000e+00> : vector<8x128xf32>
    %62 = tpu.matmul %57, %61, %cst_9 {dimension_numbers = #tpu.dot_dimension_numbers<[1], [0], [0], [1], [0, 0, 1, 1], [], []>} : vector<8x128xbf16>, vector<128x128xbf16>, vector<8x128xf32> -> vector<8x128xf32>
    %63 = arith.addf %60, %62 : vector<8x128xf32>
    %64 = arith.addf %58, %63 : vector<8x128xf32>
    %c0_10 = arith.constant 0 : index
    %c0_11 = arith.constant 0 : index
    %65 = vector.load %arg6[%c0_10, %c0_11] : memref<8x128xf32, #tpu.memory_space<vmem>>, vector<8x128xf32>
    tpu.vector_store %arg6[%c0_10, %c0_11], %64 {strides = array<i32>} : memref<8x128xf32, #tpu.memory_space<vmem>>, vector<8x128xf32>,
    %c0_i32_12 = arith.constant 0 : i32
    %66 = arith.cmpi eq, %arg1, %c0_i32_12 : i32
    %67 = arith.extui %66 : i1 to i32
    %c0_i32_13 = arith.constant 0 : i32
    %68 = arith.cmpi ne, %67, %c0_i32_13 : i32
    scf.if %68 {
      %c0_14 = arith.constant 0 : index
      %c0_15 = arith.constant 0 : index
      %69 = vector.load %arg6[%c0_14, %c0_15] : memref<8x128xf32, #tpu.memory_space<vmem>>, vector<8x128xf32>
      %c0_16 = arith.constant 0 : index
      %c0_17 = arith.constant 0 : index
      %70 = vector.load %arg5[%c0_16, %c0_17] : memref<1x128xf32, #tpu.memory_space<vmem>>, vector<1x128xf32>
      %71 = vector.broadcast %70 : vector<1x128xf32> to vector<8x128xf32>
      %72 = arith.addf %69, %71 : vector<8x128xf32>
      %73 = tpu.iota {dimensions = array<i32: 1>} : vector<8x128xi32>
      %c5_i32 = arith.constant 5 : i32
      %74 = vector.broadcast %c5_i32 : i32 to vector<8x128xi32>
      %75 = arith.cmpi slt, %73, %74 : vector<8x128xi32>
      %cst_18 = arith.constant -1.000000e+30 : f32
      %76 = vector.broadcast %cst_18 : f32 to vector<8x128xf32>
      %77 = arith.select %75, %72, %76 : vector<8x128xi1>, vector<8x128xf32>
      %cst_19 = arith.constant dense<0xFF800000> : vector<8xf32>
      %78 = vector.multi_reduction <maximumf>, %77, %cst_19 [1] : vector<8x128xf32> to vector<8xf32>
      %79 = vector.shape_cast %78 : vector<8xf32> to vector<8x1xf32>
      %80 = vector.broadcast %79 : vector<8x1xf32> to vector<8x128xf32>
      %81 = arith.subf %77, %80 : vector<8x128xf32>
      %82 = math.exp %81 : vector<8x128xf32>
      %cst_20 = arith.constant dense<0.000000e+00> : vector<8xf32>
      %83 = vector.multi_reduction <add>, %82, %cst_20 [1] : vector<8x128xf32> to vector<8xf32>
      %84 = vector.shape_cast %83 : vector<8xf32> to vector<8x1xf32>
      %85 = math.log %84 : vector<8x1xf32>
      %86 = vector.broadcast %85 : vector<8x1xf32> to vector<8x128xf32>
      %87 = arith.subf %81, %86 : vector<8x128xf32>
      %c0_21 = arith.constant 0 : index
      %c0_22 = arith.constant 0 : index
      %88 = vector.load %arg6[%c0_21, %c0_22] : memref<8x128xf32, #tpu.memory_space<vmem>>, vector<8x128xf32>
      tpu.vector_store %arg6[%c0_21, %c0_22], %87 {strides = array<i32>} : memref<8x128xf32, #tpu.memory_space<vmem>>, vector<8x128xf32>,
    } else {
    }
    return
  }
  func.func @transform_0(%arg0: i32, %arg1: i32) -> (i32, i32) {
    %c0_i32 = arith.constant 0 : i32
    %c0_i32_0 = arith.constant 0 : i32
    return %arg0, %c0_i32 : i32, i32
  }
  func.func @transform_1(%arg0: i32, %arg1: i32) -> (i32, i32) {
    %c0_i32 = arith.constant 0 : i32
    %c0_i32_0 = arith.constant 0 : i32
    return %arg1, %c0_i32 : i32, i32
  }
  func.func @transform_2(%arg0: i32, %arg1: i32) -> (i32, i32) {
    %c0_i32 = arith.constant 0 : i32
    %c0_i32_0 = arith.constant 0 : i32
    return %arg1, %c0_i32 : i32, i32
  }
  func.func @transform_3(%arg0: i32, %arg1: i32) -> (i32, i32) {
    %c0_i32 = arith.constant 0 : i32
    %c0_i32_0 = arith.constant 0 : i32
    %c0_i32_1 = arith.constant 0 : i32
    return %c0_i32, %c0_i32_0 : i32, i32
  }
  func.func @transform_4(%arg0: i32, %arg1: i32) -> (i32, i32) {
    %c0_i32 = arith.constant 0 : i32
    %c0_i32_0 = arith.constant 0 : i32
    return %arg0, %c0_i32 : i32, i32
  }
}

</mosaic_0001>

<llo_original>
// kernel: tpu_custom_call.1
$region0: #{tpu_custom_call.1}
  #allocation0 [shape = 'u32[]', space=smem, size = 0x4, offset = 0x4, fixed_abs, tag = 'smem constant byte address 0x4 - core index']
  #allocation1 [shape = 'u32[144,128]{1,0:T(1,128)}', space=vmem, size = 0x12000, scoped, tag = 'internal scratch']
  %s0 = inlined_call_operand.hbm [shape: s32[8,8], index: 0, kind: input, shape index: {}]
  %s1 = inlined_call_operand.hbm [shape: bf16[128,128], index: 1, kind: input, shape index: {}]
  %s2 = inlined_call_operand.hbm [shape: bf16[128,128], index: 2, kind: input, shape index: {}]
  %s3 = inlined_call_operand.vmem [shape: f32[1,128], index: 3, kind: input, shape index: {}]
  %s4 = inlined_call_operand.hbm [shape: f32[8,128], index: 4, kind: output, shape index: {}]
  %s5 = sld [smem:[#allocation0]]
  $region46: #{tpu_custom_call.1} parent=0
    _
  %s7 = ssub.s32 1, %s5
  %s8 = scalar_select 0, %s7, %s5
  $region1: #{tpu_custom_call.1} parent=0
    #allocation2 [shape = 'u8[4096]{0}', space=vmem, size = 0x1000, scoped, tag = 'input window, operand 0, single buffered']
    #allocation3 [shape = 's32[1]{0}', space=sflag, size = 0x4, scoped, tag = 'scoped memory for tpu_custom_call.1']
    #allocation4 [shape = 's32[1]{0}', space=sflag, size = 0x4, scoped, tag = 'scoped memory for tpu_custom_call.1']
    #allocation5 [shape = 'u8[32768]{0}', space=vmem, size = 0x8000, scoped, tag = 'input window, operand 1, single buffered']
    #allocation6 [shape = 's32[1]{0}', space=sflag, size = 0x4, scoped, tag = 'scoped memory for tpu_custom_call.1']
    #allocation7 [shape = 'u8[32768]{0}', space=vmem, size = 0x8000, scoped, tag = 'input window, operand 2, single buffered']
    #allocation8 [shape = 'u8[4096]{0}', space=vmem, size = 0x1000, scoped, tag = 'output window, operand 0, single buffered']
    %9 = vsyncpa [#allocation3], 0
    %10 = vsyncpa [#allocation6], 0
    %11 = vsyncpa [#allocation4], 0
    // Predicated region
    $region2: #{tpu_custom_call.1} parent=1 // pred_check
      _
    $region3: #{tpu_custom_call.1} parent=1 // pred_check_branch
      %13 = sbr.rel (0) target = $region5
    $region4: #{tpu_custom_call.1} parent=1 // pred_region
      %s15 = ssub.s32 128, 128
      %16 = vsyncadd [#allocation3], %s15
      %s18 = sshll.u32 [#allocation2], 4
      %s19 = int_to_ptr.vmem [resolvable:$true] %s18
      %21 = dma.hbm_to_vmem [thread:$0]  %s0, 128, %s19, [#allocation3]
    $region5: #{tpu_custom_call.1} parent=1 // pred_fallthru
      _
    // Predicated region
    $region6: #{tpu_custom_call.1} parent=1 // pred_check
      _
    $region7: #{tpu_custom_call.1} parent=1 // pred_check_branch
      %23 = sbr.rel (0) target = $region9
    $region8: #{tpu_custom_call.1} parent=1 // pred_region
      %s25 = ssub.s32 1024, 1024
      %26 = vsyncadd [#allocation6], %s25
      %s27 = sshll.u32 [#allocation5], 4
      %s28 = int_to_ptr.vmem [resolvable:$true] %s27
      %33 = dma.hbm_to_vmem [thread:$0]  %s1, 1024, %s28, [#allocation6], 64, 64, 4
    $region9: #{tpu_custom_call.1} parent=1 // pred_fallthru
      _
    // Predicated region
    $region10: #{tpu_custom_call.1} parent=1 // pred_check
      _
    $region11: #{tpu_custom_call.1} parent=1 // pred_check_branch
      %35 = sbr.rel (0) target = $region13
    $region12: #{tpu_custom_call.1} parent=1 // pred_region
      %s37 = ssub.s32 1024, 1024
      %38 = vsyncadd [#allocation6], %s37
      %s39 = sshll.u32 [#allocation7], 4
      %s40 = int_to_ptr.vmem [resolvable:$true] %s39
      %45 = dma.hbm_to_vmem [thread:$0]  %s2, 1024, %s40, [#allocation6], 64, 64, 4
    $region13: #{tpu_custom_call.1} parent=1 // pred_fallthru
      _
    // Predicated region
    $region14: #{tpu_custom_call.1} parent=1 // pred_check
      _
    $region15: #{tpu_custom_call.1} parent=1 // pred_check_branch
      %47 = sbr.rel (0) target = $region17
    $region16: #{tpu_custom_call.1} parent=1 // pred_region
      _
    $region17: #{tpu_custom_call.1} parent=1 // pred_fallthru
      _
    // Predicated region
    $region18: #{tpu_custom_call.1} parent=1 // pred_check
      _
    $region19: #{tpu_custom_call.1} parent=1 // pred_check_branch
      %49 = sbr.rel (0) target = $region21
    $region20: #{tpu_custom_call.1} parent=1 // pred_region
      %50 = dma.done [#allocation3], 128
    $region21: #{tpu_custom_call.1} parent=1 // pred_fallthru
      _
    // Predicated region
    $region22: #{tpu_custom_call.1} parent=1 // pred_check
      _
    $region23: #{tpu_custom_call.1} parent=1 // pred_check_branch
      %52 = sbr.rel (0) target = $region25
    $region24: #{tpu_custom_call.1} parent=1 // pred_region
      %53 = dma.done [#allocation6], 1024
    $region25: #{tpu_custom_call.1} parent=1 // pred_fallthru
      _
    // Predicated region
    $region26: #{tpu_custom_call.1} parent=1 // pred_check
      _
    $region27: #{tpu_custom_call.1} parent=1 // pred_check_branch
      %55 = sbr.rel (0) target = $region29
    $region28: #{tpu_custom_call.1} parent=1 // pred_region
      %56 = dma.done [#allocation6], 1024
    $region29: #{tpu_custom_call.1} parent=1 // pred_fallthru
      _
    %p58 = scmp.eq.s32.totalorder 0, 0
    // Predicated region
    $region30: #{tpu_custom_call.1} parent=1 // pred_check
      %p59 = pneg %p58
    $region31: #{tpu_custom_call.1} parent=1 // pred_check_branch
      %61 = sbr.rel (%p59) target = $region33
    $region32: #{tpu_custom_call.1} parent=1 // pred_region
      %62 = vst [vmem:[#allocation8] sm:$0xff] 0.0
    $region33: #{tpu_custom_call.1} parent=1 // pred_fallthru
      _
    %v63 = vld [vmem:[#allocation2] sm:$0xff]
    %s64 = smul.u32 0, 128
    %v65 = vstv %s64
    %v66 = vsub.s32 %v63, %v65
    %v67 = vlaneseq
    %v68 = vand.u32 %v67, 127
    %69 = vset.pattern.permute.xlu0 0
    %70 = vperm.xlu0 %69, %v66
    %v71 = vpop.permute.xlu0 %70
    %vm72 = vcmp.eq.s32.totalorder %v68, %v71
    %v73 = vsel %vm72, 1, 0
    %v74 = vcvt.s32.f32 %v73
    %v75 = vadd.f32 %v74, 0.0
    %76 = vset.pattern.permute.xlu0 1
    %77 = vperm.xlu0 %76, %v66
    %v78 = vpop.permute.xlu0 %77
    %vm79 = vcmp.eq.s32.totalorder %v68, %v78
    %v80 = vsel %vm79, 1, 0
    %v81 = vcvt.s32.f32 %v80
    %v82 = vadd.f32 %v75, %v81
    %83 = vset.pattern.permute.xlu0 2
    %84 = vperm.xlu0 %83, %v66
    %v85 = vpop.permute.xlu0 %84
    %vm86 = vcmp.eq.s32.totalorder %v68, %v85
    %v87 = vsel %vm86, 1, 0
    %v88 = vcvt.s32.f32 %v87
    %v89 = vadd.f32 %v82, %v88
    %90 = vset.pattern.permute.xlu0 3
    %91 = vperm.xlu0 %90, %v66
    %v92 = vpop.permute.xlu0 %91
    %vm93 = vcmp.eq.s32.totalorder %v68, %v92
    %v94 = vsel %vm93, 1, 0
    %v95 = vcvt.s32.f32 %v94
    %v96 = vadd.f32 %v89, %v95
    %97 = vset.pattern.permute.xlu0 4
    %98 = vperm.xlu0 %97, %v66
    %v99 = vpop.permute.xlu0 %98
    %vm100 = vcmp.eq.s32.totalorder %v68, %v99
    %v101 = vsel %vm100, 1, 0
    %v102 = vcvt.s32.f32 %v101
    %v103 = vadd.f32 %v96, %v102
    %104 = vset.pattern.permute.xlu0 5
    %105 = vperm.xlu0 %104, %v66
    %v106 = vpop.permute.xlu0 %105
    %vm107 = vcmp.eq.s32.totalorder %v68, %v106
    %v108 = vsel %vm107, 1, 0
    %v109 = vcvt.s32.f32 %v108
    %v110 = vadd.f32 %v103, %v109
    %111 = vset.pattern.permute.xlu0 6
    %112 = vperm.xlu0 %111, %v66
    %v113 = vpop.permute.xlu0 %112
    %vm114 = vcmp.eq.s32.totalorder %v68, %v113
    %v115 = vsel %vm114, 1, 0
    %v116 = vcvt.s32.f32 %v115
    %v117 = vadd.f32 %v110, %v116
    %118 = vset.pattern.permute.xlu0 7
    %119 = vperm.xlu0 %118, %v66
    %v120 = vpop.permute.xlu0 %119
    %vm121 = vcmp.eq.s32.totalorder %v68, %v120
    %v122 = vsel %vm121, 1, 0
    %v123 = vcvt.s32.f32 %v122
    %v124 = vadd.f32 %v117, %v123
    %v125 = vpack.c.bf16 %v124, %v124
    %v126 = vld [vmem:[#allocation8] sm:$0xff]
    %v127 = vld [vmem:[#allocation5] sm:$0xf]
    %v128 = vld [vmem:[#allocation5 + $0x4] sm:$0xf]
    %v129 = vld [vmem:[#allocation5 + $0x8] sm:$0xf]
    %v130 = vld [vmem:[#allocation5 + $0xc] sm:$0xf]
    %v131 = vld [vmem:[#allocation5 + $0x10] sm:$0xf]
    %v132 = vld [vmem:[#allocation5 + $0x14] sm:$0xf]
    %v133 = vld [vmem:[#allocation5 + $0x18] sm:$0xf]
    %v134 = vld [vmem:[#allocation5 + $0x1c] sm:$0xf]
    %v135 = vld [vmem:[#allocation5 + $0x20] sm:$0xf]
    %v136 = vld [vmem:[#allocation5 + $0x24] sm:$0xf]
    %v137 = vld [vmem:[#allocation5 + $0x28] sm:$0xf]
    %v138 = vld [vmem:[#allocation5 + $0x2c] sm:$0xf]
    %v139 = vld [vmem:[#allocation5 + $0x30] sm:$0xf]
    %v140 = vld [vmem:[#allocation5 + $0x34] sm:$0xf]
    %v141 = vld [vmem:[#allocation5 + $0x38] sm:$0xf]
    %v142 = vld [vmem:[#allocation5 + $0x3c] sm:$0xf]
    %v143 = vld [vmem:[#allocation7] sm:$0xf]
    %v144 = vld [vmem:[#allocation7 + $0x4] sm:$0xf]
    %v145 = vld [vmem:[#allocation7 + $0x8] sm:$0xf]
    %v146 = vld [vmem:[#allocation7 + $0xc] sm:$0xf]
    %v147 = vld [vmem:[#allocation7 + $0x10] sm:$0xf]
    %v148 = vld [vmem:[#allocation7 + $0x14] sm:$0xf]
    %v149 = vld [vmem:[#allocation7 + $0x18] sm:$0xf]
    %v150 = vld [vmem:[#allocation7 + $0x1c] sm:$0xf]
    %v151 = vld [vmem:[#allocation7 + $0x20] sm:$0xf]
    %v152 = vld [vmem:[#allocation7 + $0x24] sm:$0xf]
    %v153 = vld [vmem:[#allocation7 + $0x28] sm:$0xf]
    %v154 = vld [vmem:[#allocation7 + $0x2c] sm:$0xf]
    %v155 = vld [vmem:[#allocation7 + $0x30] sm:$0xf]
    %v156 = vld [vmem:[#allocation7 + $0x34] sm:$0xf]
    %v157 = vld [vmem:[#allocation7 + $0x38] sm:$0xf]
    %v158 = vld [vmem:[#allocation7 + $0x3c] sm:$0xf]
    %v175 = vunpack.c.l.b16 %v143
    %v176 = vunpack.c.l.b16 %v144
    %v177 = vunpack.c.l.b16 %v145
    %v178 = vunpack.c.l.b16 %v146
    %v179 = vunpack.c.l.b16 %v147
    %v180 = vunpack.c.l.b16 %v148
    %v181 = vunpack.c.l.b16 %v149
    %v182 = vunpack.c.l.b16 %v150
    %v183 = vunpack.c.l.b16 %v151
    %v184 = vunpack.c.l.b16 %v152
    %v185 = vunpack.c.l.b16 %v153
    %v186 = vunpack.c.l.b16 %v154
    %v187 = vunpack.c.l.b16 %v155
    %v188 = vunpack.c.l.b16 %v156
    %v189 = vunpack.c.l.b16 %v157
    %v190 = vunpack.c.l.b16 %v158
    %v191 = vpack.c.b16 %v176, %v175
    %v192 = vpack.c.b16 %v178, %v177
    %v193 = vpack.c.b16 %v180, %v179
    %v194 = vpack.c.b16 %v182, %v181
    %v195 = vpack.c.b16 %v184, %v183
    %v196 = vpack.c.b16 %v186, %v185
    %v197 = vpack.c.b16 %v188, %v187
    %v198 = vpack.c.b16 %v190, %v189
    %207 = vmatprep.subr.bf16.mxu0 0
    %208 = vmatpush1.bf16.msra.mxu0 %v191
    %209 = vmatprep.subr.bf16.mxu0 0
    %210 = vmatpush1.bf16.msra.mxu0 %v192
    %211 = vmatprep.subr.bf16.mxu0 0
    %212 = vmatpush1.bf16.msra.mxu0 %v193
    %213 = vmatprep.subr.bf16.mxu0 0
    %214 = vmatpush1.bf16.msra.mxu0 %v194
    %215 = vmatprep.subr.bf16.mxu0 0
    %216 = vmatpush1.bf16.msra.mxu0 %v195
    %217 = vmatprep.subr.bf16.mxu0 0
    %218 = vmatpush1.bf16.msra.mxu0 %v196
    %219 = vmatprep.subr.bf16.mxu0 0
    %220 = vmatpush1.bf16.msra.mxu0 %v197
    %221 = vmatprep.subr.bf16.mxu0 0
    %222 = vmatpush1.bf16.msra.mxu0 %v198
    %223 = vmatprep.subr.bf16.mxu0 0
    %224 = vmatpush1.bf16.msra.mxu0 0
    %225 = vmatprep.subr.bf16.mxu0 0
    %226 = vmatpush1.bf16.msra.mxu0 0
    %227 = vmatprep.subr.bf16.mxu0 0
    %228 = vmatpush1.bf16.msra.mxu0 0
    %229 = vmatprep.subr.bf16.mxu0 0
    %230 = vmatpush1.bf16.msra.mxu0 0
    %231 = vmatprep.subr.bf16.mxu0 0
    %232 = vmatpush1.bf16.msra.mxu0 0
    %233 = vmatprep.subr.bf16.mxu0 0
    %234 = vmatpush1.bf16.msra.mxu0 0
    %235 = vmatprep.subr.bf16.mxu0 0
    %236 = vmatpush1.bf16.msra.mxu0 0
    %237 = vmatprep.subr.bf16.mxu0 0
    %238 = vmatpush1.bf16.msra.mxu0 0
    %239 = vmatprep.mubr.bf16.mxu0 0
    %240 = vmatmul.mubr.bf16.gmra.mrb[0].mxu0 %v125
    %v241 = vpop.f32.mrb[0].mxu0
    %v242 = vadd.f32 0.0, %v241
    %v243 = vpop.f32.mrb[0].mxu0
    %v244 = vpop.f32.mrb[0].mxu0
    %v245 = vpop.f32.mrb[0].mxu0
    %246 = vdwg.mxu0
    %v263 = vunpack.c.l.b16 %v127
    %v264 = vunpack.c.l.b16 %v128
    %v265 = vunpack.c.l.b16 %v129
    %v266 = vunpack.c.l.b16 %v130
    %v267 = vunpack.c.l.b16 %v131
    %v268 = vunpack.c.l.b16 %v132
    %v269 = vunpack.c.l.b16 %v133
    %v270 = vunpack.c.l.b16 %v134
    %v271 = vunpack.c.l.b16 %v135
    %v272 = vunpack.c.l.b16 %v136
    %v273 = vunpack.c.l.b16 %v137
    %v274 = vunpack.c.l.b16 %v138
    %v275 = vunpack.c.l.b16 %v139
    %v276 = vunpack.c.l.b16 %v140
    %v277 = vunpack.c.l.b16 %v141
    %v278 = vunpack.c.l.b16 %v142
    %v279 = vpack.c.b16 %v264, %v263
    %v280 = vpack.c.b16 %v266, %v265
    %v281 = vpack.c.b16 %v268, %v267
    %v282 = vpack.c.b16 %v270, %v269
    %v283 = vpack.c.b16 %v272, %v271
    %v284 = vpack.c.b16 %v274, %v273
    %v285 = vpack.c.b16 %v276, %v275
    %v286 = vpack.c.b16 %v278, %v277
    %295 = vmatprep.subr.bf16.mxu0 0
    %296 = vmatpush1.bf16.msra.mxu0 %v279
    %297 = vmatprep.subr.bf16.mxu0 0
    %298 = vmatpush1.bf16.msra.mxu0 %v280
    %299 = vmatprep.subr.bf16.mxu0 0
    %300 = vmatpush1.bf16.msra.mxu0 %v281
    %301 = vmatprep.subr.bf16.mxu0 0
    %302 = vmatpush1.bf16.msra.mxu0 %v282
    %303 = vmatprep.subr.bf16.mxu0 0
    %304 = vmatpush1.bf16.msra.mxu0 %v283
    %305 = vmatprep.subr.bf16.mxu0 0
    %306 = vmatpush1.bf16.msra.mxu0 %v284
    %307 = vmatprep.subr.bf16.mxu0 0
    %308 = vmatpush1.bf16.msra.mxu0 %v285
    %309 = vmatprep.subr.bf16.mxu0 0
    %310 = vmatpush1.bf16.msra.mxu0 %v286
    %311 = vmatprep.subr.bf16.mxu0 0
    %312 = vmatpush1.bf16.msra.mxu0 0
    %313 = vmatprep.subr.bf16.mxu0 0
    %314 = vmatpush1.bf16.msra.mxu0 0
    %315 = vmatprep.subr.bf16.mxu0 0
    %316 = vmatpush1.bf16.msra.mxu0 0
    %317 = vmatprep.subr.bf16.mxu0 0
    %318 = vmatpush1.bf16.msra.mxu0 0
    %319 = vmatprep.subr.bf16.mxu0 0
    %320 = vmatpush1.bf16.msra.mxu0 0
    %321 = vmatprep.subr.bf16.mxu0 0
    %322 = vmatpush1.bf16.msra.mxu0 0
    %323 = vmatprep.subr.bf16.mxu0 0
    %324 = vmatpush1.bf16.msra.mxu0 0
    %325 = vmatprep.subr.bf16.mxu0 0
    %326 = vmatpush1.bf16.msra.mxu0 0
    %327 = vmatprep.mubr.bf16.mxu0 0
    %328 = vmatmul.mubr.bf16.gmra.mrb[0].mxu0 %v125
    %v329 = vpop.f32.mrb[0].mxu0
    %v330 = vadd.f32 %v242, %v329
    %v331 = vpop.f32.mrb[0].mxu0
    %v332 = vpop.f32.mrb[0].mxu0
    %v333 = vpop.f32.mrb[0].mxu0
    %334 = vdwg.mxu0
    %v335 = vadd.f32 %v126, %v330
    %336 = vst [vmem:[#allocation8] sm:$0xff] %v335
    // Predicated region
    $region34: #{tpu_custom_call.1} parent=1 // pred_check
      %p337 = pneg %p58
    $region35: #{tpu_custom_call.1} parent=1 // pred_check_branch
      %339 = sbr.rel (%p337) target = $region37
    $region36: #{tpu_custom_call.1} parent=1 // pred_region
      %v340 = vld [vmem:[#allocation8] sm:$0xff]
      %v341 = vld [vmem:[%s3] sm:$0x1]
      %v343 = vlaneseq
      %v344 = vshrl.u32 %v343, 7
      %v345 = vsub.s32 0, %v344
      %v346 = vrot.slane %v341, %v345
      %v348 = vadd.f32 %v340, %v346
      %vm349 = vcmp.lt.s32.totalorder %v68, 5
      %v350 = vsel %vm349, %v348, -1e+30
      %351 = vmax.xlane.f32.xlu0 %v350
      %v352 = vpop.xlane.xlu0 %351
      %v353 = vsub.f32 %v350, %v352
      %v354 = vmul.f32 %v353, 1.442695
      %v355 = vpow.pop %v354
      %356 = vadd.xlane.f32.xlu0 %v355
      %v357 = vpop.xlane.xlu0 %356
      %v358 = vlog2.pop %v357
      %v359 = vmul.f32 %v358, 0.6931472
      %v360 = vsub.f32 %v353, %v359
      %361 = vst [vmem:[#allocation8] sm:$0xff] %v360
    $region37: #{tpu_custom_call.1} parent=1 // pred_fallthru
      _
    // Predicated region
    $region38: #{tpu_custom_call.1} parent=1 // pred_check
      _
    $region39: #{tpu_custom_call.1} parent=1 // pred_check_branch
      %363 = sbr.rel (0) target = $region41
    $region40: #{tpu_custom_call.1} parent=1 // pred_region
      %s365 = ssub.s32 128, 128
      %366 = vsyncadd [#allocation4], %s365
      %s368 = sshll.u32 [#allocation8], 4
      %s369 = int_to_ptr.vmem [resolvable:$true] %s368
      %371 = dma.vmem_to_hbm [thread:$0]  %s369, 128, %s4, [#allocation4]
    $region41: #{tpu_custom_call.1} parent=1 // pred_fallthru
      _
    // Predicated region
    $region42: #{tpu_custom_call.1} parent=1 // pred_check
      _
    $region43: #{tpu_custom_call.1} parent=1 // pred_check_branch
      %373 = sbr.rel (0) target = $region45
    $region44: #{tpu_custom_call.1} parent=1 // pred_region
      %374 = dma.done [#allocation4], 128
    $region45: #{tpu_custom_call.1} parent=1 // pred_fallthru
      _
    %375 = vsyncpa [#allocation3], 1
    %376 = vsyncpa [#allocation6], 1
    %377 = vsyncpa [#allocation4], 1

// kernel: tpu_custom_call.1
$region0: #{tpu_custom_call.1}
  #allocation0 [shape = 'u32[]', space=smem, size = 0x4, offset = 0x4, fixed_abs, tag = 'smem constant byte address 0x4 - core index']
  #allocation1 [shape = 'u32[144,128]{1,0:T(1,128)}', space=vmem, size = 0x12000, scoped, tag = 'internal scratch']
  %s0 = inlined_call_operand.hbm [shape: s32[8,8], index: 0, kind: input, shape index: {}]
  %s1 = inlined_call_operand.hbm [shape: bf16[128,128], index: 1, kind: input, shape index: {}]
  %s2 = inlined_call_operand.hbm [shape: bf16[128,128], index: 2, kind: input, shape index: {}]
  %s3 = inlined_call_operand.vmem [shape: f32[1,128], index: 3, kind: input, shape index: {}]
  %s4 = inlined_call_operand.hbm [shape: f32[8,128], index: 4, kind: output, shape index: {}]
  %s5 = sld [smem:[#allocation0]]
  $region46: #{tpu_custom_call.1} parent=0
    _
  %s7 = ssub.s32 1, %s5
  %s8 = scalar_select 0, %s7, %s5
  $region1: #{tpu_custom_call.1} parent=0
    #allocation2 [shape = 'u8[4096]{0}', space=vmem, size = 0x1000, scoped, tag = 'input window, operand 0, single buffered']
    #allocation3 [shape = 's32[1]{0}', space=sflag, size = 0x4, scoped, tag = 'scoped memory for tpu_custom_call.1']
    #allocation4 [shape = 's32[1]{0}', space=sflag, size = 0x4, scoped, tag = 'scoped memory for tpu_custom_call.1']
    #allocation5 [shape = 'u8[32768]{0}', space=vmem, size = 0x8000, scoped, tag = 'input window, operand 1, single buffered']
    #allocation6 [shape = 's32[1]{0}', space=sflag, size = 0x4, scoped, tag = 'scoped memory for tpu_custom_call.1']
    #allocation7 [shape = 'u8[32768]{0}', space=vmem, size = 0x8000, scoped, tag = 'input window, operand 2, single buffered']
    #allocation8 [shape = 'u8[4096]{0}', space=vmem, size = 0x1000, scoped, tag = 'output window, operand 0, single buffered']
    %9 = vsyncpa [#allocation3], 0
    %10 = vsyncpa [#allocation6], 0
    %11 = vsyncpa [#allocation4], 0
    // Predicated region
    $region2: #{tpu_custom_call.1} parent=1 // pred_check
      _
    $region3: #{tpu_custom_call.1} parent=1 // pred_check_branch
      %13 = sbr.rel (0) target = $region5
    $region4: #{tpu_custom_call.1} parent=1 // pred_region
      %s15 = ssub.s32 128, 128
      %16 = vsyncadd [#allocation3], %s15
      %s18 = sshll.u32 [#allocation2], 4
      %s19 = int_to_ptr.vmem [resolvable:$true] %s18
      %21 = dma.hbm_to_vmem [thread:$0]  %s0, 128, %s19, [#allocation3]
    $region5: #{tpu_custom_call.1} parent=1 // pred_fallthru
      _
    // Predicated region
    $region6: #{tpu_custom_call.1} parent=1 // pred_check
      _
    $region7: #{tpu_custom_call.1} parent=1 // pred_check_branch
      %23 = sbr.rel (0) target = $region9
    $region8: #{tpu_custom_call.1} parent=1 // pred_region
      %s25 = ssub.s32 1024, 1024
      %26 = vsyncadd [#allocation6], %s25
      %s27 = sshll.u32 [#allocation5], 4
      %s28 = int_to_ptr.vmem [resolvable:$true] %s27
      %33 = dma.hbm_to_vmem [thread:$0]  %s1, 1024, %s28, [#allocation6], 64, 64, 4
    $region9: #{tpu_custom_call.1} parent=1 // pred_fallthru
      _
    // Predicated region
    $region10: #{tpu_custom_call.1} parent=1 // pred_check
      _
    $region11: #{tpu_custom_call.1} parent=1 // pred_check_branch
      %35 = sbr.rel (0) target = $region13
    $region12: #{tpu_custom_call.1} parent=1 // pred_region
      %s37 = ssub.s32 1024, 1024
      %38 = vsyncadd [#allocation6], %s37
      %s39 = sshll.u32 [#allocation7], 4
      %s40 = int_to_ptr.vmem [resolvable:$true] %s39
      %45 = dma.hbm_to_vmem [thread:$0]  %s2, 1024, %s40, [#allocation6], 64, 64, 4
    $region13: #{tpu_custom_call.1} parent=1 // pred_fallthru
      _
    // Predicated region
    $region14: #{tpu_custom_call.1} parent=1 // pred_check
      _
    $region15: #{tpu_custom_call.1} parent=1 // pred_check_branch
      %47 = sbr.rel (0) target = $region17
    $region16: #{tpu_custom_call.1} parent=1 // pred_region
      _
    $region17: #{tpu_custom_call.1} parent=1 // pred_fallthru
      _
    // Predicated region
    $region18: #{tpu_custom_call.1} parent=1 // pred_check
      _
    $region19: #{tpu_custom_call.1} parent=1 // pred_check_branch
      %49 = sbr.rel (0) target = $region21
    $region20: #{tpu_custom_call.1} parent=1 // pred_region
      %50 = dma.done [#allocation3], 128
    $region21: #{tpu_custom_call.1} parent=1 // pred_fallthru
      _
    // Predicated region
    $region22: #{tpu_custom_call.1} parent=1 // pred_check
      _
    $region23: #{tpu_custom_call.1} parent=1 // pred_check_branch
      %52 = sbr.rel (0) target = $region25
    $region24: #{tpu_custom_call.1} parent=1 // pred_region
      %53 = dma.done [#allocation6], 1024
    $region25: #{tpu_custom_call.1} parent=1 // pred_fallthru
      _
    // Predicated region
    $region26: #{tpu_custom_call.1} parent=1 // pred_check
      _
    $region27: #{tpu_custom_call.1} parent=1 // pred_check_branch
      %55 = sbr.rel (0) target = $region29
    $region28: #{tpu_custom_call.1} parent=1 // pred_region
      %56 = dma.done [#allocation6], 1024
    $region29: #{tpu_custom_call.1} parent=1 // pred_fallthru
      _
    %p58 = scmp.eq.s32.totalorder 0, 0
    // Predicated region
    $region30: #{tpu_custom_call.1} parent=1 // pred_check
      %p59 = pneg %p58
    $region31: #{tpu_custom_call.1} parent=1 // pred_check_branch
      %61 = sbr.rel (%p59) target = $region33
    $region32: #{tpu_custom_call.1} parent=1 // pred_region
      %62 = vst [vmem:[#allocation8] sm:$0xff] 0.0
    $region33: #{tpu_custom_call.1} parent=1 // pred_fallthru
      _
    %v63 = vld [vmem:[#allocation2] sm:$0xff]
    %s64 = smul.u32 0, 128
    %v65 = vstv %s64
    %v66 = vsub.s32 %v63, %v65
    %v67 = vlaneseq
    %v68 = vand.u32 %v67, 127
    %69 = vset.pattern.permute.xlu0 0
    %70 = vperm.xlu0 %69, %v66
    %v71 = vpop.permute.xlu0 %70
    %vm72 = vcmp.eq.s32.totalorder %v68, %v71
    %v73 = vsel %vm72, 1, 0
    %v74 = vcvt.s32.f32 %v73
    %v75 = vadd.f32 %v74, 0.0
    %76 = vset.pattern.permute.xlu0 1
    %77 = vperm.xlu0 %76, %v66
    %v78 = vpop.permute.xlu0 %77
    %vm79 = vcmp.eq.s32.totalorder %v68, %v78
    %v80 = vsel %vm79, 1, 0
    %v81 = vcvt.s32.f32 %v80
    %v82 = vadd.f32 %v75, %v81
    %83 = vset.pattern.permute.xlu0 2
    %84 = vperm.xlu0 %83, %v66
    %v85 = vpop.permute.xlu0 %84
    %vm86 = vcmp.eq.s32.totalorder %v68, %v85
    %v87 = vsel %vm86, 1, 0
    %v88 = vcvt.s32.f32 %v87
    %v89 = vadd.f32 %v82, %v88
    %90 = vset.pattern.permute.xlu0 3
    %91 = vperm.xlu0 %90, %v66
    %v92 = vpop.permute.xlu0 %91
    %vm93 = vcmp.eq.s32.totalorder %v68, %v92
    %v94 = vsel %vm93, 1, 0
    %v95 = vcvt.s32.f32 %v94
    %v96 = vadd.f32 %v89, %v95
    %97 = vset.pattern.permute.xlu0 4
    %98 = vperm.xlu0 %97, %v66
    %v99 = vpop.permute.xlu0 %98
    %vm100 = vcmp.eq.s32.totalorder %v68, %v99
    %v101 = vsel %vm100, 1, 0
    %v102 = vcvt.s32.f32 %v101
    %v103 = vadd.f32 %v96, %v102
    %104 = vset.pattern.permute.xlu0 5
    %105 = vperm.xlu0 %104, %v66
    %v106 = vpop.permute.xlu0 %105
    %vm107 = vcmp.eq.s32.totalorder %v68, %v106
    %v108 = vsel %vm107, 1, 0
    %v109 = vcvt.s32.f32 %v108
    %v110 = vadd.f32 %v103, %v109
    %111 = vset.pattern.permute.xlu0 6
    %112 = vperm.xlu0 %111, %v66
    %v113 = vpop.permute.xlu0 %112
    %vm114 = vcmp.eq.s32.totalorder %v68, %v113
    %v115 = vsel %vm114, 1, 0
    %v116 = vcvt.s32.f32 %v115
    %v117 = vadd.f32 %v110, %v116
    %118 = vset.pattern.permute.xlu0 7
    %119 = vperm.xlu0 %118, %v66
    %v120 = vpop.permute.xlu0 %119
    %vm121 = vcmp.eq.s32.totalorder %v68, %v120
    %v122 = vsel %vm121, 1, 0
    %v123 = vcvt.s32.f32 %v122
    %v124 = vadd.f32 %v117, %v123
    %v125 = vpack.c.bf16 %v124, %v124
    %v126 = vld [vmem:[#allocation8] sm:$0xff]
    %v127 = vld [vmem:[#allocation5] sm:$0xf]
    %v128 = vld [vmem:[#allocation5 + $0x4] sm:$0xf]
    %v129 = vld [vmem:[#allocation5 + $0x8] sm:$0xf]
    %v130 = vld [vmem:[#allocation5 + $0xc] sm:$0xf]
    %v131 = vld [vmem:[#allocation5 + $0x10] sm:$0xf]
    %v132 = vld [vmem:[#allocation5 + $0x14] sm:$0xf]
    %v133 = vld [vmem:[#allocation5 + $0x18] sm:$0xf]
    %v134 = vld [vmem:[#allocation5 + $0x1c] sm:$0xf]
    %v135 = vld [vmem:[#allocation5 + $0x20] sm:$0xf]
    %v136 = vld [vmem:[#allocation5 + $0x24] sm:$0xf]
    %v137 = vld [vmem:[#allocation5 + $0x28] sm:$0xf]
    %v138 = vld [vmem:[#allocation5 + $0x2c] sm:$0xf]
    %v139 = vld [vmem:[#allocation5 + $0x30] sm:$0xf]
    %v140 = vld [vmem:[#allocation5 + $0x34] sm:$0xf]
    %v141 = vld [vmem:[#allocation5 + $0x38] sm:$0xf]
    %v142 = vld [vmem:[#allocation5 + $0x3c] sm:$0xf]
    %v143 = vld [vmem:[#allocation7] sm:$0xf]
    %v144 = vld [vmem:[#allocation7 + $0x4] sm:$0xf]
    %v145 = vld [vmem:[#allocation7 + $0x8] sm:$0xf]
    %v146 = vld [vmem:[#allocation7 + $0xc] sm:$0xf]
    %v147 = vld [vmem:[#allocation7 + $0x10] sm:$0xf]
    %v148 = vld [vmem:[#allocation7 + $0x14] sm:$0xf]
    %v149 = vld [vmem:[#allocation7 + $0x18] sm:$0xf]
    %v150 = vld [vmem:[#allocation7 + $0x1c] sm:$0xf]
    %v151 = vld [vmem:[#allocation7 + $0x20] sm:$0xf]
    %v152 = vld [vmem:[#allocation7 + $0x24] sm:$0xf]
    %v153 = vld [vmem:[#allocation7 + $0x28] sm:$0xf]
    %v154 = vld [vmem:[#allocation7 + $0x2c] sm:$0xf]
    %v155 = vld [vmem:[#allocation7 + $0x30] sm:$0xf]
    %v156 = vld [vmem:[#allocation7 + $0x34] sm:$0xf]
    %v157 = vld [vmem:[#allocation7 + $0x38] sm:$0xf]
    %v158 = vld [vmem:[#allocation7 + $0x3c] sm:$0xf]
    %v175 = vunpack.c.l.b16 %v143
    %v176 = vunpack.c.l.b16 %v144
    %v177 = vunpack.c.l.b16 %v145
    %v178 = vunpack.c.l.b16 %v146
    %v179 = vunpack.c.l.b16 %v147
    %v180 = vunpack.c.l.b16 %v148
    %v181 = vunpack.c.l.b16 %v149
    %v182 = vunpack.c.l.b16 %v150
    %v183 = vunpack.c.l.b16 %v151
    %v184 = vunpack.c.l.b16 %v152
    %v185 = vunpack.c.l.b16 %v153
    %v186 = vunpack.c.l.b16 %v154
    %v187 = vunpack.c.l.b16 %v155
    %v188 = vunpack.c.l.b16 %v156
    %v189 = vunpack.c.l.b16 %v157
    %v190 = vunpack.c.l.b16 %v158
    %v191 = vpack.c.b16 %v176, %v175
    %v192 = vpack.c.b16 %v178, %v177
    %v193 = vpack.c.b16 %v180, %v179
    %v194 = vpack.c.b16 %v182, %v181
    %v195 = vpack.c.b16 %v184, %v183
    %v196 = vpack.c.b16 %v186, %v185
    %v197 = vpack.c.b16 %v188, %v187
    %v198 = vpack.c.b16 %v190, %v189
    %207 = vmatprep.subr.bf16.mxu0 0
    %208 = vmatpush1.bf16.msra.mxu0 %v191
    %209 = vmatprep.subr.bf16.mxu0 0
    %210 = vmatpush1.bf16.msra.mxu0 %v192
    %211 = vmatprep.subr.bf16.mxu0 0
    %212 = vmatpush1.bf16.msra.mxu0 %v193
    %213 = vmatprep.subr.bf16.mxu0 0
    %214 = vmatpush1.bf16.msra.mxu0 %v194
    %215 = vmatprep.subr.bf16.mxu0 0
    %216 = vmatpush1.bf16.msra.mxu0 %v195
    %217 = vmatprep.subr.bf16.mxu0 0
    %218 = vmatpush1.bf16.msra.mxu0 %v196
    %219 = vmatprep.subr.bf16.mxu0 0
    %220 = vmatpush1.bf16.msra.mxu0 %v197
    %221 = vmatprep.subr.bf16.mxu0 0
    %222 = vmatpush1.bf16.msra.mxu0 %v198
    %223 = vmatprep.subr.bf16.mxu0 0
    %224 = vmatpush1.bf16.msra.mxu0 0
    %225 = vmatprep.subr.bf16.mxu0 0
    %226 = vmatpush1.bf16.msra.mxu0 0
    %227 = vmatprep.subr.bf16.mxu0 0
    %228 = vmatpush1.bf16.msra.mxu0 0
    %229 = vmatprep.subr.bf16.mxu0 0
    %230 = vmatpush1.bf16.msra.mxu0 0
    %231 = vmatprep.subr.bf16.mxu0 0
    %232 = vmatpush1.bf16.msra.mxu0 0
    %233 = vmatprep.subr.bf16.mxu0 0
    %234 = vmatpush1.bf16.msra.mxu0 0
    %235 = vmatprep.subr.bf16.mxu0 0
    %236 = vmatpush1.bf16.msra.mxu0 0
    %237 = vmatprep.subr.bf16.mxu0 0
    %238 = vmatpush1.bf16.msra.mxu0 0
    %239 = vmatprep.mubr.bf16.mxu0 0
    %240 = vmatmul.mubr.bf16.gmra.mrb[0].mxu0 %v125
    %v241 = vpop.f32.mrb[0].mxu0
    %v242 = vadd.f32 0.0, %v241
    %v243 = vpop.f32.mrb[0].mxu0
    %v244 = vpop.f32.mrb[0].mxu0
    %v245 = vpop.f32.mrb[0].mxu0
    %246 = vdwg.mxu0
    %v263 = vunpack.c.l.b16 %v127
    %v264 = vunpack.c.l.b16 %v128
    %v265 = vunpack.c.l.b16 %v129
    %v266 = vunpack.c.l.b16 %v130
    %v267 = vunpack.c.l.b16 %v131
    %v268 = vunpack.c.l.b16 %v132
    %v269 = vunpack.c.l.b16 %v133
    %v270 = vunpack.c.l.b16 %v134
    %v271 = vunpack.c.l.b16 %v135
    %v272 = vunpack.c.l.b16 %v136
    %v273 = vunpack.c.l.b16 %v137
    %v274 = vunpack.c.l.b16 %v138
    %v275 = vunpack.c.l.b16 %v139
    %v276 = vunpack.c.l.b16 %v140
    %v277 = vunpack.c.l.b16 %v141
    %v278 = vunpack.c.l.b16 %v142
    %v279 = vpack.c.b16 %v264, %v263
    %v280 = vpack.c.b16 %v266, %v265
    %v281 = vpack.c.b16 %v268, %v267
    %v282 = vpack.c.b16 %v270, %v269
    %v283 = vpack.c.b16 %v272, %v271
    %v284 = vpack.c.b16 %v274, %v273
    %v285 = vpack.c.b16 %v276, %v275
    %v286 = vpack.c.b16 %v278, %v277
    %295 = vmatprep.subr.bf16.mxu0 0
    %296 = vmatpush1.bf16.msra.mxu0 %v279
    %297 = vmatprep.subr.bf16.mxu0 0
    %298 = vmatpush1.bf16.msra.mxu0 %v280
    %299 = vmatprep.subr.bf16.mxu0 0
    %300 = vmatpush1.bf16.msra.mxu0 %v281
    %301 = vmatprep.subr.bf16.mxu0 0
    %302 = vmatpush1.bf16.msra.mxu0 %v282
    %303 = vmatprep.subr.bf16.mxu0 0
    %304 = vmatpush1.bf16.msra.mxu0 %v283
    %305 = vmatprep.subr.bf16.mxu0 0
    %306 = vmatpush1.bf16.msra.mxu0 %v284
    %307 = vmatprep.subr.bf16.mxu0 0
    %308 = vmatpush1.bf16.msra.mxu0 %v285
    %309 = vmatprep.subr.bf16.mxu0 0
    %310 = vmatpush1.bf16.msra.mxu0 %v286
    %311 = vmatprep.subr.bf16.mxu0 0
    %312 = vmatpush1.bf16.msra.mxu0 0
    %313 = vmatprep.subr.bf16.mxu0 0
    %314 = vmatpush1.bf16.msra.mxu0 0
    %315 = vmatprep.subr.bf16.mxu0 0
    %316 = vmatpush1.bf16.msra.mxu0 0
    %317 = vmatprep.subr.bf16.mxu0 0
    %318 = vmatpush1.bf16.msra.mxu0 0
    %319 = vmatprep.subr.bf16.mxu0 0
    %320 = vmatpush1.bf16.msra.mxu0 0
    %321 = vmatprep.subr.bf16.mxu0 0
    %322 = vmatpush1.bf16.msra.mxu0 0
    %323 = vmatprep.subr.bf16.mxu0 0
    %324 = vmatpush1.bf16.msra.mxu0 0
    %325 = vmatprep.subr.bf16.mxu0 0
    %326 = vmatpush1.bf16.msra.mxu0 0
    %327 = vmatprep.mubr.bf16.mxu0 0
    %328 = vmatmul.mubr.bf16.gmra.mrb[0].mxu0 %v125
    %v329 = vpop.f32.mrb[0].mxu0
    %v330 = vadd.f32 %v242, %v329
    %v331 = vpop.f32.mrb[0].mxu0
    %v332 = vpop.f32.mrb[0].mxu0
    %v333 = vpop.f32.mrb[0].mxu0
    %334 = vdwg.mxu0
    %v335 = vadd.f32 %v126, %v330
    %336 = vst [vmem:[#allocation8] sm:$0xff] %v335
    // Predicated region
    $region34: #{tpu_custom_call.1} parent=1 // pred_check
      %p337 = pneg %p58
    $region35: #{tpu_custom_call.1} parent=1 // pred_check_branch
      %339 = sbr.rel (%p337) target = $region37
    $region36: #{tpu_custom_call.1} parent=1 // pred_region
      %v340 = vld [vmem:[#allocation8] sm:$0xff]
      %v341 = vld [vmem:[%s3] sm:$0x1]
      %v343 = vlaneseq
      %v344 = vshrl.u32 %v343, 7
      %v345 = vsub.s32 0, %v344
      %v346 = vrot.slane %v341, %v345
      %v348 = vadd.f32 %v340, %v346
      %vm349 = vcmp.lt.s32.totalorder %v68, 5
      %v350 = vsel %vm349, %v348, -1e+30
      %351 = vmax.xlane.f32.xlu0 %v350
      %v352 = vpop.xlane.xlu0 %351
      %v353 = vsub.f32 %v350, %v352
      %v354 = vmul.f32 %v353, 1.442695
      %v355 = vpow.pop %v354
      %356 = vadd.xlane.f32.xlu0 %v355
      %v357 = vpop.xlane.xlu0 %356
      %v358 = vlog2.pop %v357
      %v359 = vmul.f32 %v358, 0.6931472
      %v360 = vsub.f32 %v353, %v359
      %361 = vst [vmem:[#allocation8] sm:$0xff] %v360
    $region37: #{tpu_custom_call.1} parent=1 // pred_fallthru
      _
    // Predicated region
    $region38: #{tpu_custom_call.1} parent=1 // pred_check
      _
    $region39: #{tpu_custom_call.1} parent=1 // pred_check_branch
      %363 = sbr.rel (0) target = $region41
    $region40: #{tpu_custom_call.1} parent=1 // pred_region
      %s365 = ssub.s32 128, 128
      %366 = vsyncadd [#allocation4], %s365
      %s368 = sshll.u32 [#allocation8], 4
      %s369 = int_to_ptr.vmem [resolvable:$true] %s368
      %371 = dma.vmem_to_hbm [thread:$0]  %s369, 128, %s4, [#allocation4]
    $region41: #{tpu_custom_call.1} parent=1 // pred_fallthru
      _
    // Predicated region
    $region42: #{tpu_custom_call.1} parent=1 // pred_check
      _
    $region43: #{tpu_custom_call.1} parent=1 // pred_check_branch
      %373 = sbr.rel (0) target = $region45
    $region44: #{tpu_custom_call.1} parent=1 // pred_region
      %374 = dma.done [#allocation4], 128
    $region45: #{tpu_custom_call.1} parent=1 // pred_fallthru
      _
    %375 = vsyncpa [#allocation3], 1
    %376 = vsyncpa [#allocation6], 1
    %377 = vsyncpa [#allocation4], 1

</llo_original>
